<compile_context>
chip_gen: v7x
topology: tpu7x:2x2x1
jax: 0.10.0
libtpu: 0.0.40
codegen_flags: <defaults>
</compile_context>

<pallas_src>
import numpy as np
import jax
import jax.numpy as jnp
from jax.experimental import pallas as pl
from jax.experimental.pallas import tpu as pltpu


_NN_MXU_DTYPE = jnp.bfloat16     # NN cross term on the MXU; norms / d2 stay f32
_MXU_DTYPE = jnp.bfloat16        # rowcol / conv1x1 MXU operands (f32 accumulation)
_TM = 128                        # inner bank chunk == lane width of running min/argmin
_BANK_BLOCK_BYTES = 8 << 20      # resident bank block budget (v7x 64 MiB VMEM safe)
_PAD_NORM = 1e30                 # squared norm assigned to padded bank rows
_INT_MAX = 2 ** 31 - 1


# ----------------------------------------------------------------------------
# tiling helpers
# ----------------------------------------------------------------------------

def _plane_tile(n, per_plane_bytes, budget_bytes=8 << 20):
    """Largest plane-tile that divides n, is a multiple of 8 (legal as the
    second-to-last output block dim), fits the VMEM budget and leaves >=2 grid
    steps when possible.  Falls back to the full extent."""
    cap = max(1, budget_bytes // max(1, per_plane_bytes))
    if n >= 2:
        cap = min(cap, n // 2)
    for t in range(min(cap, n), 0, -1):
        if n % t == 0 and t % 8 == 0:
            return t
    return n


def _lane_tile(n, cap=512):
    """Largest multiple-of-128 divisor of n (<= cap, >=2 steps when possible)."""
    limit = min(cap, n)
    if n >= 256:
        limit = min(limit, n // 2)
    t = (limit // 128) * 128
    while t >= 128:
        if n % t == 0:
            return t
        t -= 128
    return n


# ----------------------------------------------------------------------------
# Pallas kernels
# ----------------------------------------------------------------------------

def _rowcol_kernel(x_ref, at_ref, bt_ref, o_ref):
    """out[n] = A @ x[n] @ B^T with pre-transposed operators At=(Hin,Hout), Bt=(Win,Wout).

    One in-kernel transpose (between the two MXU matmuls); the output is written
    flattened as (TN, Wout*Hout) -> lane-dense stores; the final (Wout,Hout) ->
    (Hout,Wout) transpose happens in the XLA wrapper."""
    x = x_ref[...]                                     # (TN, Hin, Win) bf16
    at = at_ref[...]                                   # (Hin, Hout)    bf16
    bt = bt_ref[...]                                   # (Win, Wout)    bf16
    tn, hin, win = x.shape
    hout = at.shape[1]
    wout = bt.shape[1]
    # contract W: (TN*Hin, Win) @ (Win, Wout) -> f32
    t = jnp.dot(x.reshape(tn * hin, win), bt, preferred_element_type=jnp.float32)
    # contract H: transpose once, then (TN*Wout, Hin) @ (Hin, Hout)
    t = jnp.swapaxes(t.reshape(tn, hin, wout), 1, 2)   # (TN, Wout, Hin)
    t = t.reshape(tn * wout, hin).astype(at.dtype)
    o = jnp.dot(t, at, preferred_element_type=jnp.float32)   # (TN*Wout, Hout)
    o_ref[...] = o.reshape(tn, wout * hout)            # lane-dense flattened


def _conv1x1_relu_kernel(w_ref, x_ref, o_ref):
    """relu((Cout, Cin) @ (Cin, T)) with batch merged into the lane dim T."""
    o_ref[...] = jnp.maximum(
        jnp.dot(w_ref[...], x_ref[...], preferred_element_type=jnp.float32), 0.0)


def _nn_kernel(x_ref, yt_ref, yn_ref, score_ref, loc_ref,
               qbf_ref, xn_ref, min_ref, arg_ref):
    """euclidean_dist(x, memory_bank) + min/argmin.

    Bank arrives pre-chunked as (n_chunks, E, 128) bf16 (plus (n_chunks, 1, 128)
    f32 squared norms) and is VMEM-resident (constant block index for the usual
    single-block case).  Running (min, argmin) is kept lane-wide in
    (tile_p, 128) scratch (VPU selects only); a single cross-lane reduction runs
    on the last bank block.  sqrt only on the final (tile_p, 1) result."""
    j = pl.program_id(1)                               # outer bank-block axis
    ncb = yt_ref.shape[0]                              # chunks in this block

    @pl.when(j == 0)
    def _():
        x = x_ref[...]
        qbf_ref[...] = x.astype(_NN_MXU_DTYPE)                       # cast once
        xn_ref[...] = jnp.sum(x * x, axis=-1, keepdims=True)         # (TP, 1) f32
        min_ref[...] = jnp.full(min_ref.shape, jnp.inf, dtype=min_ref.dtype)
        arg_ref[...] = jnp.zeros(arg_ref.shape, dtype=arg_ref.dtype)

    q = qbf_ref[...]                                   # (TP, E) bf16
    xn = xn_ref[...]                                   # (TP, 1) f32
    base = j * ncb * _TM                               # global element offset

    @pl.loop(0, ncb)
    def _(c):
        cross = jnp.dot(q, yt_ref[c], preferred_element_type=jnp.float32)  # (TP, TM)
        d2 = (xn - 2.0 * cross) + yn_ref[c]                                 # (TP, TM)
        idx = (base + c * _TM) + jax.lax.broadcasted_iota(jnp.int32, d2.shape, 1)
        better = d2 < min_ref[...]                      # earlier index wins ties
        arg_ref[...] = jnp.where(better, idx, arg_ref[...])
        min_ref[...] = jnp.where(better, d2, min_ref[...])

    @pl.when(j == pl.num_programs(1) - 1)
    def _():
        rm = min_ref[...]
        ra = arg_ref[...]
        m = jnp.min(rm, axis=1, keepdims=True)                      # (TP, 1)
        cand = jnp.where(rm == m, ra, jnp.int32(_INT_MAX))
        a = jnp.min(cand, axis=1, keepdims=True)                    # first argmin
        # lane-dense (1, TP) outputs
        score_ref[...] = jnp.transpose(jnp.sqrt(jnp.maximum(m, 0.0)), (1, 0))
        loc_ref[...] = jnp.transpose(a, (1, 0))


# ----------------------------------------------------------------------------
# Pallas wrappers
# ----------------------------------------------------------------------------

def pallas_rowcol(x, a, b):
    """x: (N, Hin, Win) f32, a: (Hout, Hin), b: (Wout, Win) -> A @ x[n] @ B^T, (N, Hout, Wout)."""
    N, Hin, Win = x.shape
    Hout, Wout = a.shape[0], b.shape[0]
    per_plane = 2 * (Hin * Win) + 4 * (Hin * Wout) + 4 * (Hout * Wout)
    tn = _plane_tile(N, per_plane)
    out = pl.pallas_call(
        _rowcol_kernel,
        out_shape=jax.ShapeDtypeStruct((N, Wout * Hout), jnp.float32),
        grid=(N // tn,),
        in_specs=[pl.BlockSpec((tn, Hin, Win), lambda i: (i, 0, 0)),
                  pl.BlockSpec((Hin, Hout), lambda i: (0, 0)),
                  pl.BlockSpec((Win, Wout), lambda i: (0, 0))],
        out_specs=pl.BlockSpec((tn, Wout * Hout), lambda i: (i, 0)),
        compiler_params=pltpu.CompilerParams(dimension_semantics=("parallel",)),
    )(x.astype(_MXU_DTYPE), a.T.astype(_MXU_DTYPE), b.T.astype(_MXU_DTYPE))
    # kernel wrote (N, Wout, Hout) flattened; restore (N, Hout, Wout) in XLA
    return jnp.transpose(out.reshape(N, Wout, Hout), (0, 2, 1))


def pallas_conv1x1_relu(x, w):
    """x: (B, Cin, H, W), w: (Cin, Cout) -> relu(conv1x1(x)), NCHW."""
    B, Cin, H, W = x.shape
    Cout = w.shape[1]
    n = B * H * W
    xc = jnp.transpose(x, (1, 0, 2, 3)).reshape(Cin, n).astype(_MXU_DTYPE)
    wt = w.T.astype(_MXU_DTYPE)
    tl = _lane_tile(n)
    out = pl.pallas_call(
        _conv1x1_relu_kernel,
        out_shape=jax.ShapeDtypeStruct((Cout, n), jnp.float32),
        grid=(n // tl,),
        in_specs=[pl.BlockSpec((Cout, Cin), lambda i: (0, 0)),
                  pl.BlockSpec((Cin, tl), lambda i: (0, i))],
        out_specs=pl.BlockSpec((Cout, tl), lambda i: (0, i)),
        compiler_params=pltpu.CompilerParams(dimension_semantics=("parallel",)),
    )(wt, xc)
    return jnp.transpose(out.reshape(Cout, B, H, W), (1, 0, 2, 3))


def pallas_nearest_neighbors(embedding, bank_chunks, bank_sq, tmo):
    """embedding: (P, E) f32; bank_chunks: (n_chunks, E, 128) bf16;
    bank_sq: (n_chunks, 1, 128) f32 -> (patch_scores (P,), locations (P,))."""
    P, E = embedding.shape
    n_chunks = bank_chunks.shape[0]
    assert bank_chunks.shape[1] == E
    m_pad = n_chunks * _TM
    ncb = tmo // _TM                     # chunks per bank block
    n_mo = m_pad // tmo                  # outer bank-block steps (1 when resident)

    tile_p = 256 if P >= 512 else 128
    p_pad = -(-P // tile_p) * tile_p
    x = embedding.astype(jnp.float32)
    if p_pad != P:
        x = jnp.zeros((p_pad, E), jnp.float32).at[:P].set(x)
    n_p = p_pad // tile_p

    scores, locs = pl.pallas_call(
        _nn_kernel,
        out_shape=(jax.ShapeDtypeStruct((1, p_pad), jnp.float32),
                   jax.ShapeDtypeStruct((1, p_pad), jnp.int32)),
        grid=(n_p, n_mo),
        in_specs=[pl.BlockSpec((tile_p, E), lambda i, j: (i, 0)),
                  pl.BlockSpec((ncb, E, _TM), lambda i, j: (j, 0, 0)),
                  pl.BlockSpec((ncb, 1, _TM), lambda i, j: (j, 0, 0))],
        out_specs=(pl.BlockSpec((1, tile_p), lambda i, j: (0, i)),
                   pl.BlockSpec((1, tile_p), lambda i, j: (0, i))),
        scratch_shapes=[pltpu.VMEM((tile_p, E), _NN_MXU_DTYPE),   # bf16 query
                        pltpu.VMEM((tile_p, 1), jnp.float32),     # query sq-norms
                        pltpu.VMEM((tile_p, _TM), jnp.float32),   # running min d2
                        pltpu.VMEM((tile_p, _TM), jnp.int32)],    # running argmin
        compiler_params=pltpu.CompilerParams(
            dimension_semantics=("parallel", "arbitrary"),
            vmem_limit_bytes=32 * 1024 * 1024),
    )(x, bank_chunks, bank_sq)
    return scores[0, :P], locs[0, :P]


# ----------------------------------------------------------------------------
# Static operator matrices (host, cached by the model): avgpool / bilinear / blur
# ----------------------------------------------------------------------------

def _avgpool3_matrix(size):
    """AvgPool2d(3,1,1, count_include_pad=True) along one axis: tridiag(1)/3."""
    m = np.zeros((size, size), np.float32)
    for i in range(size):
        for j in (i - 1, i, i + 1):
            if 0 <= j < size:
                m[i, j] = 1.0 / 3.0
    return m


def _bilinear_resize_matrix(out_size, in_size):
    """Matches F.interpolate(mode='bilinear', align_corners=False) along one axis."""
    m = np.zeros((out_size, in_size), np.float32)
    if in_size == 1:
        m[:, 0] = 1.0
        return m
    scale = in_size / out_size
    for i in range(out_size):
        src = max((i + 0.5) * scale - 0.5, 0.0)
        i0 = min(int(np.floor(src)), in_size - 1)
        i1 = min(i0 + 1, in_size - 1)
        l1 = src - i0
        m[i, i0] += 1.0 - l1
        m[i, i1] += l1
    return m


def _gaussian_blur_matrix(size, sigma=4.0):
    """anomalib AnomalyMapGenerator: GaussianBlur2d(sigma=4), reflect padding."""
    ks = 2 * int(4.0 * sigma + 0.5) + 1
    half = ks // 2
    xs = np.arange(ks, dtype=np.float64) - half
    g = np.exp(-(xs ** 2) / (2.0 * sigma ** 2))
    g /= g.sum()
    m = np.zeros((size, size), np.float32)
    for i in range(size):
        for j in range(ks):
            p = i + j - half
            if p < 0:
                p = -p
            if p >= size:
                p = 2 * (size - 1) - p
            m[i, p] += g[j]
    return m


# ----------------------------------------------------------------------------
# PatchcoreModel (Pallas)
# ----------------------------------------------------------------------------

class PatchcoreModelPallas:
    def __init__(self, input_size=(32, 32), layers=("layer2", "layer3"),
                 num_neighbors=1, c1=8, c2=16, seed=42):
        self.input_size = input_size
        self.layers = list(layers)
        self.num_neighbors = num_neighbors
        self.training = True
        self._op_cache = {}
        self.memory_bank = None
        # deterministic stand-in backbone weights (1x1 conv channel-mixers)
        k1, k2 = jax.random.split(jax.random.PRNGKey(seed))
        self.w1 = (0.2 * jax.random.normal(k1, (3, c1))).astype(jnp.float32)
        self.w2 = (0.2 * jax.random.normal(k2, (c1, c2))).astype(jnp.float32)

    # ---- memory bank: pre-chunked lane-dense bf16 bank + f32 norms, built once
    @property
    def memory_bank(self):
        return self._memory_bank

    @memory_bank.setter
    def memory_bank(self, value):
        self._memory_bank = value
        if value is None:
            self._bank_chunks = None
            self._bank_sq = None
            self._bank_tmo = None
            return
        bank = jnp.asarray(value, jnp.float32)                      # (M, E)
        M, E = bank.shape
        m_pad0 = -(-M // _TM) * _TM
        cap_m = max(_TM, (_BANK_BLOCK_BYTES // max(1, E * 2)) // _TM * _TM)
        tmo = min(m_pad0, cap_m)                                    # bank block along M
        m_pad = -(-m_pad0 // tmo) * tmo
        bank_pad = jnp.zeros((m_pad, E), jnp.float32).at[:M].set(bank)
        self._bank_chunks = jnp.transpose(
            bank_pad.reshape(m_pad // _TM, _TM, E), (0, 2, 1)).astype(_NN_MXU_DTYPE)
        sq = jnp.sum(bank * bank, axis=1)
        self._bank_sq = jnp.full((m_pad,), _PAD_NORM, jnp.float32).at[:M].set(
            sq).reshape(m_pad // _TM, 1, _TM)
        self._bank_tmo = tmo

    # ---- cached resampling operators ------------------------------------------
    def _op(self, key):
        if key not in self._op_cache:
            kind = key[0]
            if kind == "pool":                      # AvgPool2d(3,1,1) along one axis
                m = _avgpool3_matrix(key[1])
            elif kind == "pool_up":                 # bilinear upsample o avgpool
                m = _bilinear_resize_matrix(key[1], key[2]) @ _avgpool3_matrix(key[2])
            else:                                   # "amap": gaussian blur o upsample
                m = _gaussian_blur_matrix(key[1]) @ _bilinear_resize_matrix(key[1], key[2])
            self._op_cache[key] = jnp.asarray(m, jnp.float32)
        return self._op_cache[key]

    # ---- stand-in hierarchical feature extractor ------------------------------
    def _extract_features(self, x):
        # TODO(synk): pretrained timm/ResNet backbone not reproducible; stand-in pyramid.
        def down2(t):
            # TODO(synk): 2x2 stride-2 mean stays as XLA glue (not fused into conv kernel).
            B, C, H, W = t.shape
            return t.reshape(B, C, H // 2, 2, W // 2, 2).mean(axis=(3, 5))
        f1 = pallas_conv1x1_relu(down2(x), self.w1)          # (B, c1, H/2, W/2)
        f2 = pallas_conv1x1_relu(down2(f1), self.w2)         # (B, c2, H/4, W/4)
        return {self.layers[0]: f1, self.layers[1]: f2}

    # ---- module methods --------------------------------------------------------
    def generate_embedding(self, features):
        """AvgPool2d(3,1,1) + bilinear upsample are fused into per-layer rowcol calls."""
        f0 = features[self.layers[0]]
        B, C0, H0, W0 = f0.shape
        a0 = self._op(("pool", H0))
        b0 = self._op(("pool", W0))
        parts = [pallas_rowcol(f0.reshape(B * C0, H0, W0), a0, b0).reshape(B, C0, H0, W0)]
        for layer in self.layers[1:]:
            f = features[layer]
            _, C, Hin, Win = f.shape
            a = self._op(("pool_up", H0, Hin))
            b = self._op(("pool_up", W0, Win))
            parts.append(
                pallas_rowcol(f.reshape(B * C, Hin, Win), a, b).reshape(B, C, H0, W0))
        return jnp.concatenate(parts, axis=1)

    @staticmethod
    def reshape_embedding(embedding):
        e = embedding.shape[1]
        return jnp.transpose(embedding, (0, 2, 3, 1)).reshape(-1, e)

    def nearest_neighbors(self, embedding, n_neighbors=1):
        assert n_neighbors == 1  # TODO(synk): topk path for n_neighbors > 1 not implemented.
        return pallas_nearest_neighbors(embedding, self._bank_chunks,
                                        self._bank_sq, self._bank_tmo)

    def compute_anomaly_score(self, patch_scores, locations, embedding):
        if self.num_neighbors == 1:
            return jnp.max(patch_scores, axis=1)
        # TODO(synk): num_neighbors > 1 softmax re-weighting path not implemented.
        raise NotImplementedError

    def anomaly_map_generator(self, patch_scores):
        B, C, h, w = patch_scores.shape
        Hh, Ww = self.input_size
        # bilinear upsample + gaussian blur compose exactly into one operator pair
        a = self._op(("amap", Hh, h))
        b = self._op(("amap", Ww, w))
        out = pallas_rowcol(patch_scores.reshape(B * C, h, w), a, b)
        return out.reshape(B, C, Hh, Ww)

    # ---- forward ---------------------------------------------------------------
    def __call__(self, input_tensor):
        features = self._extract_features(input_tensor)
        # feature_pooler (AvgPool2d 3,1,1) is folded into generate_embedding's operators
        embedding = self.generate_embedding(features)
        # Note: the reference module unpacks (batch, _, width, height) in this
        # (mis)named order; replicated verbatim for identical behavior.
        batch_size, _, width, height = embedding.shape
        embedding = self.reshape_embedding(embedding)          # (B*H*W, E)

        if self.training:
            return embedding

        patch_scores, locations = self.nearest_neighbors(embedding, n_neighbors=1)
        patch_scores = patch_scores.reshape(batch_size, -1)
        locations = locations.reshape(batch_size, -1)
        pred_score = self.compute_anomaly_score(patch_scores, locations, embedding)
        patch_scores = patch_scores.reshape(batch_size, 1, width, height)
        anomaly_map = self.anomaly_map_generator(patch_scores)
        return {"anomaly_map": anomaly_map, "pred_score": pred_score}


# ----------------------------------------------------------------------------
# main
# ----------------------------------------------------------------------------

if __name__ == "__main__":
    key = jax.random.PRNGKey(0)
    x = jax.random.normal(key, (2, 3, 32, 32), dtype=jnp.float32)   # NCHW

    model = PatchcoreModelPallas(input_size=(32, 32),
                                 layers=("layer2", "layer3"),
                                 num_neighbors=1)

    # training forward -> embedding (B*H*W, E) = (512, 24)
    embedding = jax.block_until_ready(model(x))
    assert embedding.shape == (2 * 16 * 16, 8 + 16)

    # fill memory bank (stride subsample stands in for KCenterGreedy coreset)
    model.memory_bank = embedding[::8]                               # (64, 24)

    # inference forward -> anomaly map + image score
    model.training = False
    out = jax.block_until_ready(model(x))
    assert out["anomaly_map"].shape == (2, 1, 32, 32)
    assert out["pred_score"].shape == (2,)
    assert bool(jnp.all(jnp.isfinite(out["anomaly_map"])))
    assert bool(jnp.all(jnp.isfinite(out["pred_score"])))

    print("KERNEL_OK")
</pallas_src>

<mosaic_0001>
module attributes {stable_mosaic.version = 11 : i64} {
  func.func @_conv1x1_relu_kernel(%arg0: i32, %arg1: memref<8x3xbf16, #tpu.memory_space<vmem>>, %arg2: memref<3x256xbf16, #tpu.memory_space<vmem>>, %arg3: memref<8x256xf32, #tpu.memory_space<vmem>>) attributes {dimension_semantics = [#tpu.dimension_semantics<parallel>], iteration_bounds = array<i64: 2>, scalar_prefetch = 0 : i64, scratch_operands = 0 : i64, tpu.core_type = #tpu.core_type<tc>, window_params = [{pipeline_mode = #tpu.pipeline_mode<synchronous>, transform_indices = @transform_0, window_bounds = array<i64: 8, 3>}, {transform_indices = @transform_1, window_bounds = array<i64: 3, 256>}, {transform_indices = @transform_2, window_bounds = array<i64: 8, 256>}]} {
    %c0 = arith.constant 0 : index
    %c0_0 = arith.constant 0 : index
    %0 = vector.load %arg1[%c0, %c0_0] : memref<8x3xbf16, #tpu.memory_space<vmem>>, vector<8x3xbf16>
    %c0_1 = arith.constant 0 : index
    %c0_2 = arith.constant 0 : index
    %1 = vector.load %arg2[%c0_1, %c0_2] : memref<3x256xbf16, #tpu.memory_space<vmem>>, vector<3x256xbf16>
    %cst = arith.constant dense<0.000000e+00> : vector<8x256xf32>
    %2 = tpu.matmul %0, %1, %cst {dimension_numbers = #tpu.dot_dimension_numbers<[1], [0], [0], [1], [0, 0, 1, 1], [], []>} : vector<8x3xbf16>, vector<3x256xbf16>, vector<8x256xf32> -> vector<8x256xf32>
    %cst_3 = arith.constant 0.000000e+00 : f32
    %3 = vector.broadcast %cst_3 : f32 to vector<8x256xf32>
    %4 = arith.maximumf %2, %3 : vector<8x256xf32>
    %c0_4 = arith.constant 0 : index
    %c0_5 = arith.constant 0 : index
    %5 = vector.load %arg3[%c0_4, %c0_5] : memref<8x256xf32, #tpu.memory_space<vmem>>, vector<8x256xf32>
    tpu.vector_store %arg3[%c0_4, %c0_5], %4 {strides = array<i32>} : memref<8x256xf32, #tpu.memory_space<vmem>>, vector<8x256xf32>,
    return
  }
  func.func @transform_0(%arg0: i32) -> (i32, i32) {
    %c0_i32 = arith.constant 0 : i32
    %c0_i32_0 = arith.constant 0 : i32
    %c0_i32_1 = arith.constant 0 : i32
    return %c0_i32, %c0_i32_0 : i32, i32
  }
  func.func @transform_1(%arg0: i32) -> (i32, i32) {
    %c0_i32 = arith.constant 0 : i32
    %c0_i32_0 = arith.constant 0 : i32
    return %c0_i32, %arg0 : i32, i32
  }
  func.func @transform_2(%arg0: i32) -> (i32, i32) {
    %c0_i32 = arith.constant 0 : i32
    %c0_i32_0 = arith.constant 0 : i32
    return %c0_i32, %arg0 : i32, i32
  }
}

</mosaic_0001>

<llo_original>
// kernel: tpu_custom_call.1
$region0: #{tpu_custom_call.1}
  #allocation0 [shape = 'u32[]', space=smem, size = 0x4, offset = 0x4, fixed_abs, tag = 'smem constant byte address 0x4 - core index']
  #allocation1 [shape = 'u32[144,128]{1,0:T(1,128)}', space=vmem, size = 0x12000, scoped, tag = 'internal scratch']
  %s0 = inlined_call_operand.vmem [shape: bf16[8,3], index: 0, kind: input, shape index: {}]
  %s1 = inlined_call_operand.vmem [shape: bf16[3,512], index: 1, kind: input, shape index: {}]
  %s2 = inlined_call_operand.hbm [shape: f32[8,512], index: 2, kind: output, shape index: {}]
  %s3 = sld [smem:[#allocation0]]
  $region41: #{tpu_custom_call.1} parent=0
    _
  %s5 = ssub.s32 1, %s3
  %s6 = scalar_select 0, %s5, %s3
  $region1: #{tpu_custom_call.1} parent=0
    #allocation2 [shape = 'u8[16384]{0}', space=vmem, size = 0x4000, scoped, tag = 'output window, operand 0']
    #allocation3 [shape = 's32[2]{0}', space=sflag, size = 0x8, scoped, tag = 'scoped memory for tpu_custom_call.1']
    %7 = vsyncpa [#allocation3], 0
    %s8 = scalar_lea.sflag [#allocation3], 1
    %9 = vsyncpa %s8, 0
    loop: start=0, step=1, limit=4
    $region2: #{tpu_custom_call.1} parent=1 // loop_pre_header
      _
    $region3: #{tpu_custom_call.1} parent=1 // loop_header
      %s11 = sphi 0, %s15
      %p12 = scmp.ge.s32.totalorder %s11, 4
      %s19 = sphi 0, %s19
      %s21 = sphi 0, %s19
      %s22 = sphi 0, %s21
      %s36 = sphi 0, %s22
      %s42 = sphi 0, %s44
      %s45 = sphi 0, %s42
      %s46 = sphi 0, %s45
      %s62 = sphi 0, %s46
      %s68 = sphi 0, %s70
      %s71 = sphi 0, %s68
      %s72 = sphi 0, %s71
      %s88 = sphi 0, %s72
    $region4: #{tpu_custom_call.1} parent=1 // loop_header_branch
      %14 = sbr.rel (%p12) target = $region8
    $region5: #{tpu_custom_call.1} parent=1 // loop_body
      %s16 = ssub.s32 %s11, 1
      %s17 = ssub.s32 %s11, 2
      %s18 = sadd.s32 %s11, 1
      %s20 = sadd.s32 %s19, 1
      %p23 = scmp.eq.s32.totalorder %s11, 1
      %p24 = scmp.ne.s32.totalorder %s19, %s21
      %p25 = scmp.eq.s32.totalorder %s11, 0
      %p26 = por %p24, %p25
      %p27 = scmp.ne.s32.totalorder %s19, %s21
      %p28 = scmp.eq.s32.totalorder %s16, 1
      %p29 = por %p27, %p28
      %p30 = scmp.ne.s32.totalorder %s21, %s22
      %p31 = scmp.eq.s32.totalorder %s16, 0
      %p32 = por %p30, %p31
      %p33 = scmp.ne.s32.totalorder %s21, %s22
      %p34 = scmp.eq.s32.totalorder %s17, 1
      %p35 = por %p33, %p34
      %p37 = scmp.ne.s32.totalorder %s22, %s36
      %p38 = scmp.eq.s32.totalorder %s17, 0
      %p39 = por %p37, %p38
      %s40 = ssub.s32 %s11, %s18
      %p41 = scmp.eq.s32.totalorder %s40, 0
      %s43 = sadd.s32 %s42, 1
      %s44 = scalar_select %p41, %s42, %s43
      %p47 = pneg %p41
      %p48 = scmp.eq.s32.totalorder %s11, 1
      %p49 = por %p47, %p48
      %p50 = scmp.ne.s32.totalorder %s42, %s45
      %p51 = scmp.eq.s32.totalorder %s11, 0
      %p52 = por %p50, %p51
      %p53 = scmp.ne.s32.totalorder %s42, %s45
      %p54 = scmp.eq.s32.totalorder %s16, 1
      %p55 = por %p53, %p54
      %p56 = scmp.ne.s32.totalorder %s45, %s46
      %p57 = scmp.eq.s32.totalorder %s16, 0
      %p58 = por %p56, %p57
      %p59 = scmp.ne.s32.totalorder %s45, %s46
      %p60 = scmp.eq.s32.totalorder %s17, 1
      %p61 = por %p59, %p60
      %p63 = scmp.ne.s32.totalorder %s46, %s62
      %p64 = scmp.eq.s32.totalorder %s17, 0
      %p65 = por %p63, %p64
      %s66 = ssub.s32 %s11, %s18
      %p67 = scmp.eq.s32.totalorder %s66, 0
      %s69 = sadd.s32 %s68, 1
      %s70 = scalar_select %p67, %s68, %s69
      %p73 = pneg %p67
      %p74 = scmp.eq.s32.totalorder %s11, 1
      %p75 = por %p73, %p74
      %p76 = scmp.ne.s32.totalorder %s68, %s71
      %p77 = scmp.eq.s32.totalorder %s11, 0
      %p78 = por %p76, %p77
      %p79 = scmp.ne.s32.totalorder %s68, %s71
      %p80 = scmp.eq.s32.totalorder %s16, 1
      %p81 = por %p79, %p80
      %p82 = scmp.ne.s32.totalorder %s71, %s72
      %p83 = scmp.eq.s32.totalorder %s16, 0
      %p84 = por %p82, %p83
      %p85 = scmp.ne.s32.totalorder %s71, %s72
      %p86 = scmp.eq.s32.totalorder %s17, 1
      %p87 = por %p85, %p86
      %p89 = scmp.ne.s32.totalorder %s72, %s88
      %p90 = scmp.eq.s32.totalorder %s17, 0
      %p91 = por %p89, %p90
      %p92 = scmp.le.s32.totalorder 1, %s11
      %p93 = scmp.lt.s32.totalorder %s11, 3
      %p94 = pnand %p92, %p93
      %p95 = pneg %p94
      // Predicated region
      $region9: #{tpu_custom_call.1} parent=5 // pred_check
        _
      $region10: #{tpu_custom_call.1} parent=5 // pred_check_branch
        %97 = sbr.rel (%p94) target = $region12
      $region11: #{tpu_custom_call.1} parent=5 // pred_region
        %s98 = ssub.s32 %s11, 1
        // Predicated region
        $region13: #{tpu_custom_call.1} parent=11 // pred_check
          %p99 = pneg %p32
        $region14: #{tpu_custom_call.1} parent=11 // pred_check_branch
          %101 = sbr.rel (%p99) target = $region16
        $region15: #{tpu_custom_call.1} parent=11 // pred_region
          _
        $region16: #{tpu_custom_call.1} parent=11 // pred_fallthru
          _
      $region12: #{tpu_custom_call.1} parent=5 // pred_fallthru
        _
      %p102 = scmp.lt.s32.totalorder %s11, 2
      // Predicated region
      $region17: #{tpu_custom_call.1} parent=5 // pred_check
        %p103 = pneg %p102
      $region18: #{tpu_custom_call.1} parent=5 // pred_check_branch
        %105 = sbr.rel (%p103) target = $region20
      $region19: #{tpu_custom_call.1} parent=5 // pred_region
        // Predicated region
        $region21: #{tpu_custom_call.1} parent=19 // pred_check
          %p106 = pneg %p52
        $region22: #{tpu_custom_call.1} parent=19 // pred_check_branch
          %108 = sbr.rel (%p106) target = $region24
        $region23: #{tpu_custom_call.1} parent=19 // pred_region
          %s109 = smul.u32 2, %s11
          %p110 = scmp.lt.s32.totalorder %s109, 3
          %s111 = scalar_select %p110, %s109, 3
          %s112 = smul.addr %s111, 2
          %s113 = scalar_lea.vmem %s1, %s112
          %s114 = smul.u32 2, %s11
        $region24: #{tpu_custom_call.1} parent=19 // pred_fallthru
          _
      $region20: #{tpu_custom_call.1} parent=5 // pred_fallthru
        _
      %p115 = scmp.le.s32.totalorder 1, %s11
      %p116 = scmp.lt.s32.totalorder %s11, 3
      %p117 = pnand %p115, %p116
      %p118 = pneg %p117
      // Predicated region
      $region25: #{tpu_custom_call.1} parent=5 // pred_check
        _
      $region26: #{tpu_custom_call.1} parent=5 // pred_check_branch
        %120 = sbr.rel (%p117) target = $region28
      $region27: #{tpu_custom_call.1} parent=5 // pred_region
        %s121 = ssub.s32 %s11, 1
        %p122 = pneg %p32
        %p123 = pneg %p29
        %s124 = smul.u32 2, %s16
        %p125 = scmp.lt.s32.totalorder %s124, 3
        %s126 = scalar_select %p125, %s124, 3
        %s127 = smul.addr %s126, 2
        %s128 = scalar_lea.vmem %s1, %s127
        %p129 = pneg %p58
        %p130 = pneg %p55
        %p131 = pneg %p84
        %p132 = pneg %p81
        %s133 = sand.u32 %s71, 1
        %s134 = scalar_lea.sflag [#allocation3], %s133
        %s135 = sand.u32 %s71, 1
        %s136 = smul.addr %s135, 16
        %s137 = scalar_lea.vmem [#allocation2], %s136
        %s138 = smul.u32 2, %s16
        %p139 = scmp.lt.s32.totalorder %s138, 3
        %s140 = scalar_select %p139, %s138, 3
        %s141 = smul.addr %s140, 2
        %s142 = scalar_lea.vmem %s1, %s141
        %s143 = smul.u32 2, %s16
        %s144 = smul.u32 2, %s16
        %v146 = vld [vmem:[%s0] sm:$0xf]
        %v147 = vld [vmem:[%s142] sm:$0xf]
        %v150 = vunpack.c.l.s4 1983009808
        %v151 = vunpack.c.0.s8 %v150
        %v152 = vlaneseq
        %v153 = vshrl.u32 %v152, 7
        %v154 = vsub.s32 %v151, %v153
        %v155 = vrot.slane %v147, %v154
        %v156 = vcombine.high %v155, %v155
        %vm157 = vcmask 23552
        %v159 = vsel %vm157, %v146, 0
        %vm161 = vcmask 1040384
        %vm162 = vcmask 1041408
        %v163 = vsel %vm161, 4294967295, 65535
        %v164 = vsel %vm162, %v163, 0
        %v166 = vand.u32 %v155, %v164
        %v169 = vand.u32 %v156, %v164
        %171 = vmatprep.subr.bf16.mxu0 %v169
        %172 = vmatpush1.bf16.msra.mxu0 %v166
        %173 = vmatprep.subr.bf16.mxu0 0
        %174 = vmatpush1.bf16.msra.mxu0 0
        %175 = vmatprep.subr.bf16.mxu0 0
        %176 = vmatpush1.bf16.msra.mxu0 0
        %177 = vmatprep.subr.bf16.mxu0 0
        %178 = vmatpush1.bf16.msra.mxu0 0
        %179 = vmatprep.subr.bf16.mxu0 0
        %180 = vmatpush1.bf16.msra.mxu0 0
        %181 = vmatprep.subr.bf16.mxu0 0
        %182 = vmatpush1.bf16.msra.mxu0 0
        %183 = vmatprep.subr.bf16.mxu0 0
        %184 = vmatpush1.bf16.msra.mxu0 0
        %185 = vmatprep.subr.bf16.mxu0 0
        %186 = vmatpush1.bf16.msra.mxu0 0
        %187 = vmatprep.subr.bf16.mxu0 0
        %188 = vmatpush1.bf16.msra.mxu0 0
        %189 = vmatprep.subr.bf16.mxu0 0
        %190 = vmatpush1.bf16.msra.mxu0 0
        %191 = vmatprep.subr.bf16.mxu0 0
        %192 = vmatpush1.bf16.msra.mxu0 0
        %193 = vmatprep.subr.bf16.mxu0 0
        %194 = vmatpush1.bf16.msra.mxu0 0
        %195 = vmatprep.subr.bf16.mxu0 0
        %196 = vmatpush1.bf16.msra.mxu0 0
        %197 = vmatprep.subr.bf16.mxu0 0
        %198 = vmatpush1.bf16.msra.mxu0 0
        %199 = vmatprep.subr.bf16.mxu0 0
        %200 = vmatpush1.bf16.msra.mxu0 0
        %201 = vmatprep.subr.bf16.mxu0 0
        %202 = vmatpush1.bf16.msra.mxu0 0
        %203 = vmatprep.mubr.bf16.mxu0 0
        %204 = vmatmul.mubr.bf16.gmra.mrb[0].mxu0 %v159
        %v205 = vpop.f32.mrb[0].mxu0
        %v206 = vadd.f32 0.0, %v205
        %v207 = vpop.f32.mrb[0].mxu0
        %v208 = vadd.f32 0.0, %v207
        %v209 = vpop.f32.mrb[0].mxu0
        %v210 = vpop.f32.mrb[0].mxu0
        %211 = vdwg.mxu0
        %v212 = vmax.f32 %v206, 0.0
        %v213 = vmax.f32 %v208, 0.0
        %214 = vst [vmem:[%s137] sm:$0xff] %v212
        %215 = vst [vmem:[%s137 + $0x8] sm:$0xff] %v213
        %s216 = sand.u32 %s71, 1
        %s217 = scalar_lea.sflag [#allocation3], %s216
        %s218 = sand.u32 %s71, 1
        %s219 = smul.addr %s218, 16
        %s220 = scalar_lea.vmem [#allocation2], %s219
        // Predicated region
        $region29: #{tpu_custom_call.1} parent=27 // pred_check
          %p221 = pneg %p81
        $region30: #{tpu_custom_call.1} parent=27 // pred_check_branch
          %223 = sbr.rel (%p221) target = $region32
        $region31: #{tpu_custom_call.1} parent=27 // pred_region
          %s224 = smul.u32 2, %s16
          %s226 = ssub.s32 256, 256
          %227 = vsyncadd %s217, %s226
          %s228 = smul.addr %s224, 128
          %s229 = scalar_lea.hbm %s2, %s228
          %s231 = sshll.u32 %s220, 4
          %s232 = int_to_ptr.vmem [resolvable:$true] %s231
          %234 = dma.vmem_to_hbm [thread:$0]  %s232, 256, %s229, %s217
        $region32: #{tpu_custom_call.1} parent=27 // pred_fallthru
          _
      $region28: #{tpu_custom_call.1} parent=5 // pred_fallthru
        _
      %p235 = scmp.le.s32.totalorder 2, %s11
      // Predicated region
      $region33: #{tpu_custom_call.1} parent=5 // pred_check
        %p236 = pneg %p235
      $region34: #{tpu_custom_call.1} parent=5 // pred_check_branch
        %238 = sbr.rel (%p236) target = $region36
      $region35: #{tpu_custom_call.1} parent=5 // pred_region
        %s239 = ssub.s32 %s11, 2
        // Predicated region
        $region37: #{tpu_custom_call.1} parent=35 // pred_check
          %p240 = pneg %p87
        $region38: #{tpu_custom_call.1} parent=35 // pred_check_branch
          %242 = sbr.rel (%p240) target = $region40
        $region39: #{tpu_custom_call.1} parent=35 // pred_region
          %s243 = sand.u32 %s72, 1
          %s244 = scalar_lea.sflag [#allocation3], %s243
          %s245 = sand.u32 %s72, 1
          %s246 = smul.addr %s245, 16
          %s247 = scalar_lea.vmem [#allocation2], %s246
          %248 = dma.done %s244, 256
        $region40: #{tpu_custom_call.1} parent=35 // pred_fallthru
          _
      $region36: #{tpu_custom_call.1} parent=5 // pred_fallthru
        _
    $region6: #{tpu_custom_call.1} parent=1 // loop_footer
      %s15 = sadd.s32 1, %s11
    $region7: #{tpu_custom_call.1} parent=1 // loop_footer_branch
      %10 = sbr.rel target = $region3
    $region8: #{tpu_custom_call.1} parent=1 // loop_exit
      _
    %249 = vsyncpa [#allocation3], 1
    %s250 = scalar_lea.sflag [#allocation3], 1
    %251 = vsyncpa %s250, 1

</llo_original>
